<compile_context>
chip_gen: v5e
topology: v5e:2x2
jax: 0.10.0
libtpu: 0.0.40
codegen_flags: <defaults>
</compile_context>

<pallas_src>
import jax
import jax.numpy as jnp
from jax.experimental import pallas as pl
from jax.experimental.pallas import tpu as pltpu

NUM_CLASSES = 10
INPUT_SIZE = 784
HIDDEN_SIZE = 128

_LANES = 128
_SUBLANES = 8
_TILE_BUDGET_BYTES = 4 * 1024 * 1024   # per pipelined input buffer


def _round_up(n, m):
    return ((n + m - 1) // m) * m


def _pick_tile(n, candidates, row_bytes, budget=_TILE_BUDGET_BYTES):
    """Largest candidate that divides n and keeps one buffer under budget."""
    for c in candidates:
        if n % c == 0 and c * row_bytes <= budget:
            return c
    return _SUBLANES


# ----------------------------- Phase 1 kernel ------------------------------
def input_proj_kernel(x_ref, wih_ref, bias_ref, pre_ref):
    # x_ref:    (tile_m, I)  f32   rows of reshape(x, (B*T, I))
    # wih_ref:  (I, H)       bf16  = W_ih^T
    # bias_ref: (1, H)       f32   = b_ih + b_hh (folded once)
    # pre_ref:  (tile_m, H)  f32
    x_bf = x_ref[...].astype(jnp.bfloat16)            # bf16 MXU operand
    pre_ref[...] = (
        jnp.dot(x_bf, wih_ref[...], preferred_element_type=jnp.float32)
        + bias_ref[...]
    )


# ----------------------------- Phase 2 kernel ------------------------------
def recurrence_fc_kernel(pre_ref, whh_ref, wfc_ref, bfc_ref, out_ref):
    # pre_ref: (tile_b, T, H) f32  precomputed x_t @ W_ih^T + bias
    # whh_ref: (H, H)         bf16 = W_hh^T
    # wfc_ref: (H, Cp)        bf16 = W_fc^T zero-padded to lane-dense Cp
    # bfc_ref: (1, Cp)        f32  zero-padded bias
    # out_ref: (tile_b, Cp)   f32  lane-dense logits
    T = pre_ref.shape[1]
    whh = whh_ref[...]
    # t = 0: h_{-1} = 0, so the W_hh term vanishes.
    h = jnp.tanh(pre_ref[:, 0, :])
    # Fully-unrolled static recurrence: carried h stays f32, only the MXU
    # operands are cast to bf16.  T is small/fixed for this module.
    # TODO(synk): for very large T, switch to a chunk-unrolled loop to bound
    # compile time.
    for t in range(1, T):
        hh = jnp.dot(h.astype(jnp.bfloat16), whh,
                     preferred_element_type=jnp.float32)
        h = jnp.tanh(pre_ref[:, t, :] + hh)
    logits = jnp.dot(h.astype(jnp.bfloat16), wfc_ref[...],
                     preferred_element_type=jnp.float32) + bfc_ref[...]
    out_ref[...] = logits.astype(out_ref.dtype)


# ------------------------------- parameters --------------------------------
def init_params(key, input_size=INPUT_SIZE, hidden_size=HIDDEN_SIZE,
                num_classes=NUM_CLASSES):
    """Deterministic synthetic parameters matching nn.RNN / nn.Linear shapes.

    PyTorch stores W_ih as (H, I), W_hh as (H, H), fc.weight as (C, H); we keep
    them pre-transposed (f32) for row-major matmuls in the kernels.
    """
    ks = jax.random.split(key, 6)
    scale = 0.05
    wih_t = scale * jax.random.normal(ks[0], (input_size, hidden_size), jnp.float32)
    whh_t = scale * jax.random.normal(ks[1], (hidden_size, hidden_size), jnp.float32)
    bih = scale * jax.random.normal(ks[2], (1, hidden_size), jnp.float32)
    bhh = scale * jax.random.normal(ks[3], (1, hidden_size), jnp.float32)
    wfc_t = scale * jax.random.normal(ks[4], (hidden_size, num_classes), jnp.float32)
    bfc = scale * jax.random.normal(ks[5], (1, num_classes), jnp.float32)
    return wih_t, whh_t, bih, bhh, wfc_t, bfc


# -------------------------------- forward ----------------------------------
def rnn_forward(x, params):
    """Forward pass matching RNN.forward. x: (B, T, I) or (B, I), float32."""
    if x.ndim == 2:
        x = x[:, None, :]                               # unsqueeze(1)
    wih_t, whh_t, bih, bhh, wfc_t, bfc = params
    B, T, I = x.shape
    H = whh_t.shape[0]
    C = wfc_t.shape[1]
    Cp = _round_up(max(C, _LANES), _LANES)              # lane-dense classifier

    # Kernel-ready parameters (tiny; constant-folded under jit).
    bias = bih + bhh                                    # (1, H) f32, folded once
    wih_bf = wih_t.astype(jnp.bfloat16)                 # (I, H)
    whh_bf = whh_t.astype(jnp.bfloat16)                 # (H, H)
    wfc_bf = jnp.pad(wfc_t, ((0, 0), (0, Cp - C))).astype(jnp.bfloat16)
    bfc_p = jnp.pad(bfc, ((0, 0), (0, Cp - C)))         # (1, Cp) f32

    # ---- Phase 1: hoisted input projection (one big parallel matmul) ----
    M = B * T
    Mp = _round_up(M, _SUBLANES)
    x2d = x.reshape(M, I)                               # free contiguous view
    if Mp != M:
        x2d = jnp.pad(x2d, ((0, Mp - M), (0, 0)))
    tile_m = _pick_tile(Mp, (512, 256, 128, 64, 32, 16, 8), I * 4)
    pre2d = pl.pallas_call(
        input_proj_kernel,
        out_shape=jax.ShapeDtypeStruct((Mp, H), jnp.float32),
        grid_spec=pltpu.PrefetchScalarGridSpec(
            num_scalar_prefetch=0,
            grid=(Mp // tile_m,),
            in_specs=[
                pl.BlockSpec((tile_m, I), lambda m: (m, 0)),
                pl.BlockSpec((I, H), lambda m: (0, 0)),      # resident weight
                pl.BlockSpec((1, H), lambda m: (0, 0)),      # resident bias
            ],
            out_specs=pl.BlockSpec((tile_m, H), lambda m: (m, 0)),
        ),
        compiler_params=pltpu.CompilerParams(
            dimension_semantics=("parallel",)),
    )(x2d, wih_bf, bias)

    # ---- Phase 2: serial recurrence + classifier (batch tiles in parallel) ----
    Bp = _round_up(B, _SUBLANES)
    pre3 = pre2d[:M].reshape(B, T, H)
    if Bp != B:
        pre3 = jnp.pad(pre3, ((0, Bp - B), (0, 0), (0, 0)))
    tile_b = _pick_tile(Bp, (256, 128, 64, 32, 16, 8), T * H * 4)
    logits_p = pl.pallas_call(
        recurrence_fc_kernel,
        out_shape=jax.ShapeDtypeStruct((Bp, Cp), jnp.float32),
        grid_spec=pltpu.PrefetchScalarGridSpec(
            num_scalar_prefetch=0,
            grid=(Bp // tile_b,),
            in_specs=[
                pl.BlockSpec((tile_b, T, H), lambda b: (b, 0, 0)),
                pl.BlockSpec((H, H), lambda b: (0, 0)),      # resident W_hh^T
                pl.BlockSpec((H, Cp), lambda b: (0, 0)),     # resident W_fc^T
                pl.BlockSpec((1, Cp), lambda b: (0, 0)),     # resident b_fc
            ],
            out_specs=pl.BlockSpec((tile_b, Cp), lambda b: (b, 0)),
        ),
        compiler_params=pltpu.CompilerParams(
            dimension_semantics=("parallel",)),
    )(pre3, whh_bf, wfc_bf, bfc_p)

    return logits_p[:B, :C]


# ------------------------------- references --------------------------------
def rnn_forward_ref(x, params, emulate_bf16=False):
    """Pure-JAX reference. emulate_bf16=True mirrors the kernel's MXU numerics."""
    if x.ndim == 2:
        x = x[:, None, :]
    wih_t, whh_t, bih, bhh, wfc_t, bfc = params
    B, T, _ = x.shape
    H = whh_t.shape[0]
    cast = (lambda a: a.astype(jnp.bfloat16)) if emulate_bf16 else (lambda a: a)

    def mm(a, b):
        return jnp.dot(cast(a), cast(b), preferred_element_type=jnp.float32)

    bias = bih + bhh
    h = jnp.zeros((B, H), jnp.float32)
    for t in range(T):
        h = jnp.tanh(mm(x[:, t, :], wih_t) + mm(h, whh_t) + bias)
    return mm(h, wfc_t) + bfc


# ---------------------------------- main ------------------------------------
if __name__ == "__main__":
    key = jax.random.PRNGKey(0)
    k_param, k_x = jax.random.split(key)
    params = init_params(k_param)

    B, T = 8, 4
    x = jax.random.normal(k_x, (B, T, INPUT_SIZE), jnp.float32)

    fwd = jax.jit(rnn_forward)
    out = jax.block_until_ready(fwd(x, params))
    assert out.shape == (B, NUM_CLASSES), out.shape

    # Tight check against a reference that mirrors the kernel's bf16-operand /
    # f32-accumulate MXU numerics; loose check against the pure-f32 reference.
    ref_bf16 = rnn_forward_ref(x, params, emulate_bf16=True)
    ref_f32 = rnn_forward_ref(x, params, emulate_bf16=False)
    assert jnp.allclose(out, ref_bf16, atol=2e-3, rtol=2e-3), \
        float(jnp.max(jnp.abs(out - ref_bf16)))
    assert jnp.allclose(out, ref_f32, atol=1e-1, rtol=1e-1), \
        float(jnp.max(jnp.abs(out - ref_f32)))

    # Also exercise the 2-D input path of the module (x.dim() == 2 -> T = 1).
    x2 = x[:, 0, :]
    out2 = jax.block_until_ready(fwd(x2, params))
    ref2 = rnn_forward_ref(x2, params, emulate_bf16=True)
    assert out2.shape == (B, NUM_CLASSES), out2.shape
    assert jnp.allclose(out2, ref2, atol=2e-3, rtol=2e-3), \
        float(jnp.max(jnp.abs(out2 - ref2)))

    print("KERNEL_OK")
</pallas_src>

<mosaic_0001>
module attributes {stable_mosaic.version = 11 : i64} {
  func.func @input_proj_kernel(%arg0: i32, %arg1: memref<32x784xf32, #tpu.memory_space<vmem>>, %arg2: memref<784x128xbf16, #tpu.memory_space<vmem>>, %arg3: memref<1x128xf32, #tpu.memory_space<vmem>>, %arg4: memref<32x128xf32, #tpu.memory_space<vmem>>) attributes {dimension_semantics = [#tpu.dimension_semantics<parallel>], iteration_bounds = array<i64: 1>, scalar_prefetch = 0 : i64, scratch_operands = 0 : i64, tpu.core_type = #tpu.core_type<tc>, window_params = [{transform_indices = @transform_0, window_bounds = array<i64: 32, 784>}, {pipeline_mode = #tpu.pipeline_mode<synchronous>, transform_indices = @transform_1, window_bounds = array<i64: 784, 128>}, {pipeline_mode = #tpu.pipeline_mode<synchronous>, transform_indices = @transform_2, window_bounds = array<i64: 1, 128>}, {transform_indices = @transform_3, window_bounds = array<i64: 32, 128>}]} {
    %c0 = arith.constant 0 : index
    %c0_0 = arith.constant 0 : index
    %0 = vector.load %arg1[%c0, %c0_0] : memref<32x784xf32, #tpu.memory_space<vmem>>, vector<32x784xf32>
    %1 = arith.truncf %0 : vector<32x784xf32> to vector<32x784xbf16>
    %c0_1 = arith.constant 0 : index
    %c0_2 = arith.constant 0 : index
    %2 = vector.load %arg2[%c0_1, %c0_2] : memref<784x128xbf16, #tpu.memory_space<vmem>>, vector<784x128xbf16>
    %cst = arith.constant dense<0.000000e+00> : vector<32x128xf32>
    %3 = tpu.matmul %1, %2, %cst {dimension_numbers = #tpu.dot_dimension_numbers<[1], [0], [0], [1], [0, 0, 1, 1], [], []>} : vector<32x784xbf16>, vector<784x128xbf16>, vector<32x128xf32> -> vector<32x128xf32>
    %c0_3 = arith.constant 0 : index
    %c0_4 = arith.constant 0 : index
    %4 = vector.load %arg3[%c0_3, %c0_4] : memref<1x128xf32, #tpu.memory_space<vmem>>, vector<1x128xf32>
    %5 = vector.broadcast %4 : vector<1x128xf32> to vector<32x128xf32>
    %6 = arith.addf %3, %5 : vector<32x128xf32>
    %c0_5 = arith.constant 0 : index
    %c0_6 = arith.constant 0 : index
    %7 = vector.load %arg4[%c0_5, %c0_6] : memref<32x128xf32, #tpu.memory_space<vmem>>, vector<32x128xf32>
    tpu.vector_store %arg4[%c0_5, %c0_6], %6 {strides = array<i32>} : memref<32x128xf32, #tpu.memory_space<vmem>>, vector<32x128xf32>,
    return
  }
  func.func @transform_0(%arg0: i32) -> (i32, i32) {
    %c0_i32 = arith.constant 0 : i32
    %c0_i32_0 = arith.constant 0 : i32
    return %arg0, %c0_i32 : i32, i32
  }
  func.func @transform_1(%arg0: i32) -> (i32, i32) {
    %c0_i32 = arith.constant 0 : i32
    %c0_i32_0 = arith.constant 0 : i32
    %c0_i32_1 = arith.constant 0 : i32
    return %c0_i32, %c0_i32_0 : i32, i32
  }
  func.func @transform_2(%arg0: i32) -> (i32, i32) {
    %c0_i32 = arith.constant 0 : i32
    %c0_i32_0 = arith.constant 0 : i32
    %c0_i32_1 = arith.constant 0 : i32
    return %c0_i32, %c0_i32_0 : i32, i32
  }
  func.func @transform_3(%arg0: i32) -> (i32, i32) {
    %c0_i32 = arith.constant 0 : i32
    %c0_i32_0 = arith.constant 0 : i32
    return %arg0, %c0_i32 : i32, i32
  }
}

module attributes {stable_mosaic.version = 11 : i64} {
  func.func @recurrence_fc_kernel(%arg0: i32, %arg1: memref<8x4x128xf32, #tpu.memory_space<vmem>>, %arg2: memref<128x128xbf16, #tpu.memory_space<vmem>>, %arg3: memref<128x128xbf16, #tpu.memory_space<vmem>>, %arg4: memref<1x128xf32, #tpu.memory_space<vmem>>, %arg5: memref<8x128xf32, #tpu.memory_space<vmem>>) attributes {dimension_semantics = [#tpu.dimension_semantics<parallel>], iteration_bounds = array<i64: 1>, scalar_prefetch = 0 : i64, scratch_operands = 0 : i64, tpu.core_type = #tpu.core_type<tc>, window_params = [{transform_indices = @transform_0, window_bounds = array<i64: 8, 4, 128>}, {pipeline_mode = #tpu.pipeline_mode<synchronous>, transform_indices = @transform_1, window_bounds = array<i64: 128, 128>}, {pipeline_mode = #tpu.pipeline_mode<synchronous>, transform_indices = @transform_2, window_bounds = array<i64: 128, 128>}, {pipeline_mode = #tpu.pipeline_mode<synchronous>, transform_indices = @transform_3, window_bounds = array<i64: 1, 128>}, {transform_indices = @transform_4, window_bounds = array<i64: 8, 128>}]} {
    %c0 = arith.constant 0 : index
    %c0_0 = arith.constant 0 : index
    %0 = vector.load %arg2[%c0, %c0_0] : memref<128x128xbf16, #tpu.memory_space<vmem>>, vector<128x128xbf16>
    %c0_1 = arith.constant 0 : index
    %c0_2 = arith.constant 0 : index
    %c0_3 = arith.constant 0 : index
    %1 = vector.load %arg1[%c0_1, %c0_2, %c0_3] : memref<8x4x128xf32, #tpu.memory_space<vmem>>, vector<8x1x128xf32>
    %2 = vector.shape_cast %1 : vector<8x1x128xf32> to vector<8x128xf32>
    %3 = math.tanh %2 : vector<8x128xf32>
    %4 = arith.truncf %3 : vector<8x128xf32> to vector<8x128xbf16>
    %cst = arith.constant dense<0.000000e+00> : vector<8x128xf32>
    %5 = tpu.matmul %4, %0, %cst {dimension_numbers = #tpu.dot_dimension_numbers<[1], [0], [0], [1], [0, 0, 1, 1], [], []>} : vector<8x128xbf16>, vector<128x128xbf16>, vector<8x128xf32> -> vector<8x128xf32>
    %c0_4 = arith.constant 0 : index
    %c1 = arith.constant 1 : index
    %c0_5 = arith.constant 0 : index
    %6 = vector.load %arg1[%c0_4, %c1, %c0_5] : memref<8x4x128xf32, #tpu.memory_space<vmem>>, vector<8x1x128xf32>
    %7 = vector.shape_cast %6 : vector<8x1x128xf32> to vector<8x128xf32>
    %8 = arith.addf %7, %5 : vector<8x128xf32>
    %9 = math.tanh %8 : vector<8x128xf32>
    %10 = arith.truncf %9 : vector<8x128xf32> to vector<8x128xbf16>
    %cst_6 = arith.constant dense<0.000000e+00> : vector<8x128xf32>
    %11 = tpu.matmul %10, %0, %cst_6 {dimension_numbers = #tpu.dot_dimension_numbers<[1], [0], [0], [1], [0, 0, 1, 1], [], []>} : vector<8x128xbf16>, vector<128x128xbf16>, vector<8x128xf32> -> vector<8x128xf32>
    %c0_7 = arith.constant 0 : index
    %c2 = arith.constant 2 : index
    %c0_8 = arith.constant 0 : index
    %12 = vector.load %arg1[%c0_7, %c2, %c0_8] : memref<8x4x128xf32, #tpu.memory_space<vmem>>, vector<8x1x128xf32>
    %13 = vector.shape_cast %12 : vector<8x1x128xf32> to vector<8x128xf32>
    %14 = arith.addf %13, %11 : vector<8x128xf32>
    %15 = math.tanh %14 : vector<8x128xf32>
    %16 = arith.truncf %15 : vector<8x128xf32> to vector<8x128xbf16>
    %cst_9 = arith.constant dense<0.000000e+00> : vector<8x128xf32>
    %17 = tpu.matmul %16, %0, %cst_9 {dimension_numbers = #tpu.dot_dimension_numbers<[1], [0], [0], [1], [0, 0, 1, 1], [], []>} : vector<8x128xbf16>, vector<128x128xbf16>, vector<8x128xf32> -> vector<8x128xf32>
    %c0_10 = arith.constant 0 : index
    %c3 = arith.constant 3 : index
    %c0_11 = arith.constant 0 : index
    %18 = vector.load %arg1[%c0_10, %c3, %c0_11] : memref<8x4x128xf32, #tpu.memory_space<vmem>>, vector<8x1x128xf32>
    %19 = vector.shape_cast %18 : vector<8x1x128xf32> to vector<8x128xf32>
    %20 = arith.addf %19, %17 : vector<8x128xf32>
    %21 = math.tanh %20 : vector<8x128xf32>
    %22 = arith.truncf %21 : vector<8x128xf32> to vector<8x128xbf16>
    %c0_12 = arith.constant 0 : index
    %c0_13 = arith.constant 0 : index
    %23 = vector.load %arg3[%c0_12, %c0_13] : memref<128x128xbf16, #tpu.memory_space<vmem>>, vector<128x128xbf16>
    %cst_14 = arith.constant dense<0.000000e+00> : vector<8x128xf32>
    %24 = tpu.matmul %22, %23, %cst_14 {dimension_numbers = #tpu.dot_dimension_numbers<[1], [0], [0], [1], [0, 0, 1, 1], [], []>} : vector<8x128xbf16>, vector<128x128xbf16>, vector<8x128xf32> -> vector<8x128xf32>
    %c0_15 = arith.constant 0 : index
    %c0_16 = arith.constant 0 : index
    %25 = vector.load %arg4[%c0_15, %c0_16] : memref<1x128xf32, #tpu.memory_space<vmem>>, vector<1x128xf32>
    %26 = vector.broadcast %25 : vector<1x128xf32> to vector<8x128xf32>
    %27 = arith.addf %24, %26 : vector<8x128xf32>
    %c0_17 = arith.constant 0 : index
    %c0_18 = arith.constant 0 : index
    %28 = vector.load %arg5[%c0_17, %c0_18] : memref<8x128xf32, #tpu.memory_space<vmem>>, vector<8x128xf32>
    tpu.vector_store %arg5[%c0_17, %c0_18], %27 {strides = array<i32>} : memref<8x128xf32, #tpu.memory_space<vmem>>, vector<8x128xf32>,
    return
  }
  func.func @transform_0(%arg0: i32) -> (i32, i32, i32) {
    %c0_i32 = arith.constant 0 : i32
    %c0_i32_0 = arith.constant 0 : i32
    %c0_i32_1 = arith.constant 0 : i32
    return %arg0, %c0_i32, %c0_i32_0 : i32, i32, i32
  }
  func.func @transform_1(%arg0: i32) -> (i32, i32) {
    %c0_i32 = arith.constant 0 : i32
    %c0_i32_0 = arith.constant 0 : i32
    %c0_i32_1 = arith.constant 0 : i32
    return %c0_i32, %c0_i32_0 : i32, i32
  }
  func.func @transform_2(%arg0: i32) -> (i32, i32) {
    %c0_i32 = arith.constant 0 : i32
    %c0_i32_0 = arith.constant 0 : i32
    %c0_i32_1 = arith.constant 0 : i32
    return %c0_i32, %c0_i32_0 : i32, i32
  }
  func.func @transform_3(%arg0: i32) -> (i32, i32) {
    %c0_i32 = arith.constant 0 : i32
    %c0_i32_0 = arith.constant 0 : i32
    %c0_i32_1 = arith.constant 0 : i32
    return %c0_i32, %c0_i32_0 : i32, i32
  }
  func.func @transform_4(%arg0: i32) -> (i32, i32) {
    %c0_i32 = arith.constant 0 : i32
    %c0_i32_0 = arith.constant 0 : i32
    return %arg0, %c0_i32 : i32, i32
  }
}

</mosaic_0001>

<llo_original>
// kernel: rnn_forward.2
$region0: #{rnn_forward.2}
  #allocation0 [shape = 'u32[]', space=smem, size = 0x4, offset = 0x4, fixed_abs, tag = 'smem constant byte address 0x4 - core index']
  #allocation1 [shape = 'u32[72,128]{1,0:T(1,128)}', space=vmem, size = 0x9000, scoped, tag = 'internal scratch']
  %s0 = inlined_call_operand.vmem [shape: f32[32,784], index: 0, kind: input, shape index: {}]
  %s1 = inlined_call_operand.vmem [shape: bf16[784,128], index: 1, kind: input, shape index: {}]
  %s2 = inlined_call_operand.vmem [shape: f32[1,128], index: 2, kind: input, shape index: {}]
  %s3 = inlined_call_operand.vmem [shape: f32[32,128], index: 3, kind: output, shape index: {}]
  %s4 = sld [smem:[#allocation0]]
  $region22: #{rnn_forward.2} parent=0
    _
  %s6 = ssub.s32 1, %s4
  %s7 = scalar_select 0, %s6, %s4
  // Predicated region
  $region2: #{rnn_forward.2} parent=0 // pred_check
    _
  $region3: #{rnn_forward.2} parent=0 // pred_check_branch
    %9 = sbr.rel (0) target = $region5
  $region4: #{rnn_forward.2} parent=0 // pred_region
    _
  $region5: #{rnn_forward.2} parent=0 // pred_fallthru
    _
  // Predicated region
  $region6: #{rnn_forward.2} parent=0 // pred_check
    _
  $region7: #{rnn_forward.2} parent=0 // pred_check_branch
    %11 = sbr.rel (0) target = $region9
  $region8: #{rnn_forward.2} parent=0 // pred_region
    _
  $region9: #{rnn_forward.2} parent=0 // pred_fallthru
    _
  // Predicated region
  $region10: #{rnn_forward.2} parent=0 // pred_check
    _
  $region11: #{rnn_forward.2} parent=0 // pred_check_branch
    %13 = sbr.rel (0) target = $region13
  $region12: #{rnn_forward.2} parent=0 // pred_region
    _
  $region13: #{rnn_forward.2} parent=0 // pred_fallthru
    _
  %v15 = vld [vmem:[%s0] sm:$0xff]
  %v16 = vld [vmem:[%s0 + $0x8] sm:$0xff]
  %v17 = vld [vmem:[%s0 + $0x10] sm:$0xff]
  %v18 = vld [vmem:[%s0 + $0x18] sm:$0xff]
  %v19 = vld [vmem:[%s0 + $0x20] sm:$0xff]
  %v20 = vld [vmem:[%s0 + $0x28] sm:$0xff]
  %v21 = vld [vmem:[%s0 + $0x30] sm:$0xff]
  %v22 = vld [vmem:[%s0 + $0x38] sm:$0xff]
  %v23 = vld [vmem:[%s0 + $0x40] sm:$0xff]
  %v24 = vld [vmem:[%s0 + $0x48] sm:$0xff]
  %v25 = vld [vmem:[%s0 + $0x50] sm:$0xff]
  %v26 = vld [vmem:[%s0 + $0x58] sm:$0xff]
  %v27 = vld [vmem:[%s0 + $0x60] sm:$0xff]
  %v28 = vld [vmem:[%s0 + $0x68] sm:$0xff]
  %v29 = vld [vmem:[%s0 + $0x70] sm:$0xff]
  %v30 = vld [vmem:[%s0 + $0x78] sm:$0xff]
  %v31 = vld [vmem:[%s0 + $0x80] sm:$0xff]
  %v32 = vld [vmem:[%s0 + $0x88] sm:$0xff]
  %v33 = vld [vmem:[%s0 + $0x90] sm:$0xff]
  %v34 = vld [vmem:[%s0 + $0x98] sm:$0xff]
  %v35 = vld [vmem:[%s0 + $0xa0] sm:$0xff]
  %v36 = vld [vmem:[%s0 + $0xa8] sm:$0xff]
  %v37 = vld [vmem:[%s0 + $0xb0] sm:$0xff]
  %v38 = vld [vmem:[%s0 + $0xb8] sm:$0xff]
  %v39 = vld [vmem:[%s0 + $0xc0] sm:$0xff]
  %v40 = vld [vmem:[%s0 + $0xc8] sm:$0xff]
  %v41 = vld [vmem:[%s0 + $0xd0] sm:$0xff]
  %v42 = vld [vmem:[%s0 + $0xd8] sm:$0xff]
  %v43 = vpack.c.bf16 %v22, %v15
  %v44 = vpack.c.bf16 %v23, %v16
  %v45 = vpack.c.bf16 %v24, %v17
  %v46 = vpack.c.bf16 %v25, %v18
  %v47 = vpack.c.bf16 %v26, %v19
  %v48 = vpack.c.bf16 %v27, %v20
  %v49 = vpack.c.bf16 %v28, %v21
  %v50 = vpack.c.bf16 %v36, %v29
  %v51 = vpack.c.bf16 %v37, %v30
  %v52 = vpack.c.bf16 %v38, %v31
  %v53 = vpack.c.bf16 %v39, %v32
  %v54 = vpack.c.bf16 %v40, %v33
  %v55 = vpack.c.bf16 %v41, %v34
  %v56 = vpack.c.bf16 %v42, %v35
  %v57 = vld [vmem:[%s1] sm:$0xf]
  %v58 = vld [vmem:[%s1 + $0x4] sm:$0xf]
  %v59 = vld [vmem:[%s1 + $0x8] sm:$0xf]
  %v60 = vld [vmem:[%s1 + $0xc] sm:$0xf]
  %v61 = vld [vmem:[%s1 + $0x10] sm:$0xf]
  %v62 = vld [vmem:[%s1 + $0x14] sm:$0xf]
  %v63 = vld [vmem:[%s1 + $0x18] sm:$0xf]
  %v64 = vld [vmem:[%s1 + $0x1c] sm:$0xf]
  %v65 = vld [vmem:[%s1 + $0x20] sm:$0xf]
  %v66 = vld [vmem:[%s1 + $0x24] sm:$0xf]
  %v67 = vld [vmem:[%s1 + $0x28] sm:$0xf]
  %v68 = vld [vmem:[%s1 + $0x2c] sm:$0xf]
  %v69 = vld [vmem:[%s1 + $0x30] sm:$0xf]
  %v70 = vld [vmem:[%s1 + $0x34] sm:$0xf]
  %v71 = vld [vmem:[%s1 + $0x38] sm:$0xf]
  %v72 = vld [vmem:[%s1 + $0x3c] sm:$0xf]
  %v73 = vld [vmem:[%s1 + $0x40] sm:$0xf]
  %v74 = vld [vmem:[%s1 + $0x44] sm:$0xf]
  %v75 = vld [vmem:[%s1 + $0x48] sm:$0xf]
  %v76 = vld [vmem:[%s1 + $0x4c] sm:$0xf]
  %v77 = vld [vmem:[%s1 + $0x50] sm:$0xf]
  %v78 = vld [vmem:[%s1 + $0x54] sm:$0xf]
  %v79 = vld [vmem:[%s1 + $0x58] sm:$0xf]
  %v80 = vld [vmem:[%s1 + $0x5c] sm:$0xf]
  %v81 = vld [vmem:[%s1 + $0x60] sm:$0xf]
  %v82 = vld [vmem:[%s1 + $0x64] sm:$0xf]
  %v83 = vld [vmem:[%s1 + $0x68] sm:$0xf]
  %v84 = vld [vmem:[%s1 + $0x6c] sm:$0xf]
  %v85 = vld [vmem:[%s1 + $0x70] sm:$0xf]
  %v86 = vld [vmem:[%s1 + $0x74] sm:$0xf]
  %v87 = vld [vmem:[%s1 + $0x78] sm:$0xf]
  %v88 = vld [vmem:[%s1 + $0x7c] sm:$0xf]
  %v89 = vld [vmem:[%s1 + $0x80] sm:$0xf]
  %v90 = vld [vmem:[%s1 + $0x84] sm:$0xf]
  %v91 = vld [vmem:[%s1 + $0x88] sm:$0xf]
  %v92 = vld [vmem:[%s1 + $0x8c] sm:$0xf]
  %v93 = vld [vmem:[%s1 + $0x90] sm:$0xf]
  %v94 = vld [vmem:[%s1 + $0x94] sm:$0xf]
  %v95 = vld [vmem:[%s1 + $0x98] sm:$0xf]
  %v96 = vld [vmem:[%s1 + $0x9c] sm:$0xf]
  %v97 = vld [vmem:[%s1 + $0xa0] sm:$0xf]
  %v98 = vld [vmem:[%s1 + $0xa4] sm:$0xf]
  %v99 = vld [vmem:[%s1 + $0xa8] sm:$0xf]
  %v100 = vld [vmem:[%s1 + $0xac] sm:$0xf]
  %v101 = vld [vmem:[%s1 + $0xb0] sm:$0xf]
  %v102 = vld [vmem:[%s1 + $0xb4] sm:$0xf]
  %v103 = vld [vmem:[%s1 + $0xb8] sm:$0xf]
  %v104 = vld [vmem:[%s1 + $0xbc] sm:$0xf]
  %v105 = vld [vmem:[%s1 + $0xc0] sm:$0xf]
  %v106 = vld [vmem:[%s1 + $0xc4] sm:$0xf]
  %v107 = vld [vmem:[%s1 + $0xc8] sm:$0xf]
  %v108 = vld [vmem:[%s1 + $0xcc] sm:$0xf]
  %v109 = vld [vmem:[%s1 + $0xd0] sm:$0xf]
  %v110 = vld [vmem:[%s1 + $0xd4] sm:$0xf]
  %v111 = vld [vmem:[%s1 + $0xd8] sm:$0xf]
  %v112 = vld [vmem:[%s1 + $0xdc] sm:$0xf]
  %v113 = vld [vmem:[%s1 + $0xe0] sm:$0xf]
  %v114 = vld [vmem:[%s1 + $0xe4] sm:$0xf]
  %v115 = vld [vmem:[%s1 + $0xe8] sm:$0xf]
  %v116 = vld [vmem:[%s1 + $0xec] sm:$0xf]
  %v117 = vld [vmem:[%s1 + $0xf0] sm:$0xf]
  %v118 = vld [vmem:[%s1 + $0xf4] sm:$0xf]
  %v119 = vld [vmem:[%s1 + $0xf8] sm:$0xf]
  %v120 = vld [vmem:[%s1 + $0xfc] sm:$0xf]
  %v121 = vld [vmem:[%s1 + $0x100] sm:$0xf]
  %v122 = vld [vmem:[%s1 + $0x104] sm:$0xf]
  %v123 = vld [vmem:[%s1 + $0x108] sm:$0xf]
  %v124 = vld [vmem:[%s1 + $0x10c] sm:$0xf]
  %v125 = vld [vmem:[%s1 + $0x110] sm:$0xf]
  %v126 = vld [vmem:[%s1 + $0x114] sm:$0xf]
  %v127 = vld [vmem:[%s1 + $0x118] sm:$0xf]
  %v128 = vld [vmem:[%s1 + $0x11c] sm:$0xf]
  %v129 = vld [vmem:[%s1 + $0x120] sm:$0xf]
  %v130 = vld [vmem:[%s1 + $0x124] sm:$0xf]
  %v131 = vld [vmem:[%s1 + $0x128] sm:$0xf]
  %v132 = vld [vmem:[%s1 + $0x12c] sm:$0xf]
  %v133 = vld [vmem:[%s1 + $0x130] sm:$0xf]
  %v134 = vld [vmem:[%s1 + $0x134] sm:$0xf]
  %v135 = vld [vmem:[%s1 + $0x138] sm:$0xf]
  %v136 = vld [vmem:[%s1 + $0x13c] sm:$0xf]
  %v137 = vld [vmem:[%s1 + $0x140] sm:$0xf]
  %v138 = vld [vmem:[%s1 + $0x144] sm:$0xf]
  %v139 = vld [vmem:[%s1 + $0x148] sm:$0xf]
  %v140 = vld [vmem:[%s1 + $0x14c] sm:$0xf]
  %v141 = vld [vmem:[%s1 + $0x150] sm:$0xf]
  %v142 = vld [vmem:[%s1 + $0x154] sm:$0xf]
  %v143 = vld [vmem:[%s1 + $0x158] sm:$0xf]
  %v144 = vld [vmem:[%s1 + $0x15c] sm:$0xf]
  %v145 = vld [vmem:[%s1 + $0x160] sm:$0xf]
  %v146 = vld [vmem:[%s1 + $0x164] sm:$0xf]
  %v147 = vld [vmem:[%s1 + $0x168] sm:$0xf]
  %v148 = vld [vmem:[%s1 + $0x16c] sm:$0xf]
  %v149 = vld [vmem:[%s1 + $0x170] sm:$0xf]
  %v150 = vld [vmem:[%s1 + $0x174] sm:$0xf]
  %v151 = vld [vmem:[%s1 + $0x178] sm:$0xf]
  %v152 = vld [vmem:[%s1 + $0x17c] sm:$0xf]
  %v153 = vld [vmem:[%s1 + $0x180] sm:$0xf]
  %v154 = vld [vmem:[%s1 + $0x184] sm:$0xf]
  %v155 = vld [vmem:[%s2] sm:$0x1]
  %v157 = vperm.slane %v155, 0
  %v257 = vunpack.c.l.b16 %v57
  %v258 = vunpack.c.l.b16 %v58
  %v259 = vunpack.c.l.b16 %v59
  %v260 = vunpack.c.l.b16 %v60
  %v261 = vunpack.c.l.b16 %v61
  %v262 = vunpack.c.l.b16 %v62
  %v263 = vunpack.c.l.b16 %v63
  %v264 = vunpack.c.l.b16 %v64
  %v265 = vunpack.c.l.b16 %v65
  %v266 = vunpack.c.l.b16 %v66
  %v267 = vunpack.c.l.b16 %v67
  %v268 = vunpack.c.l.b16 %v68
  %v269 = vunpack.c.l.b16 %v69
  %v270 = vunpack.c.l.b16 %v70
  %v271 = vunpack.c.l.b16 %v71
  %v272 = vunpack.c.l.b16 %v72
  %v273 = vunpack.c.l.b16 %v73
  %v274 = vunpack.c.l.b16 %v74
  %v275 = vunpack.c.l.b16 %v75
  %v276 = vunpack.c.l.b16 %v76
  %v277 = vunpack.c.l.b16 %v77
  %v278 = vunpack.c.l.b16 %v78
  %v279 = vunpack.c.l.b16 %v79
  %v280 = vunpack.c.l.b16 %v80
  %v281 = vunpack.c.l.b16 %v81
  %v282 = vunpack.c.l.b16 %v82
  %v283 = vunpack.c.l.b16 %v83
  %v284 = vunpack.c.l.b16 %v84
  %v285 = vunpack.c.l.b16 %v85
  %v286 = vunpack.c.l.b16 %v86
  %v287 = vunpack.c.l.b16 %v87
  %v288 = vunpack.c.l.b16 %v88
  %v289 = vunpack.c.l.b16 %v89
  %v290 = vunpack.c.l.b16 %v90
  %v291 = vunpack.c.l.b16 %v91
  %v292 = vunpack.c.l.b16 %v92
  %v293 = vunpack.c.l.b16 %v93
  %v294 = vunpack.c.l.b16 %v94
  %v295 = vunpack.c.l.b16 %v95
  %v296 = vunpack.c.l.b16 %v96
  %v297 = vunpack.c.l.b16 %v97
  %v298 = vunpack.c.l.b16 %v98
  %v299 = vunpack.c.l.b16 %v99
  %v300 = vunpack.c.l.b16 %v100
  %v301 = vunpack.c.l.b16 %v101
  %v302 = vunpack.c.l.b16 %v102
  %v303 = vunpack.c.l.b16 %v103
  %v304 = vunpack.c.l.b16 %v104
  %v305 = vunpack.c.l.b16 %v105
  %v306 = vunpack.c.l.b16 %v106
  %v307 = vunpack.c.l.b16 %v107
  %v308 = vunpack.c.l.b16 %v108
  %v309 = vunpack.c.l.b16 %v109
  %v310 = vunpack.c.l.b16 %v110
  %v311 = vunpack.c.l.b16 %v111
  %v312 = vunpack.c.l.b16 %v112
  %v313 = vunpack.c.l.b16 %v113
  %v314 = vunpack.c.l.b16 %v114
  %v315 = vunpack.c.l.b16 %v115
  %v316 = vunpack.c.l.b16 %v116
  %v317 = vunpack.c.l.b16 %v117
  %v318 = vunpack.c.l.b16 %v118
  %v319 = vunpack.c.l.b16 %v119
  %v320 = vunpack.c.l.b16 %v120
  %v321 = vunpack.c.l.b16 %v121
  %v322 = vunpack.c.l.b16 %v122
  %v323 = vunpack.c.l.b16 %v123
  %v324 = vunpack.c.l.b16 %v124
  %v325 = vunpack.c.l.b16 %v125
  %v326 = vunpack.c.l.b16 %v126
  %v327 = vunpack.c.l.b16 %v127
  %v328 = vunpack.c.l.b16 %v128
  %v329 = vunpack.c.l.b16 %v129
  %v330 = vunpack.c.l.b16 %v130
  %v331 = vunpack.c.l.b16 %v131
  %v332 = vunpack.c.l.b16 %v132
  %v333 = vunpack.c.l.b16 %v133
  %v334 = vunpack.c.l.b16 %v134
  %v335 = vunpack.c.l.b16 %v135
  %v336 = vunpack.c.l.b16 %v136
  %v337 = vunpack.c.l.b16 %v137
  %v338 = vunpack.c.l.b16 %v138
  %v339 = vunpack.c.l.b16 %v139
  %v340 = vunpack.c.l.b16 %v140
  %v341 = vunpack.c.l.b16 %v141
  %v342 = vunpack.c.l.b16 %v142
  %v343 = vunpack.c.l.b16 %v143
  %v344 = vunpack.c.l.b16 %v144
  %v345 = vunpack.c.l.b16 %v145
  %v346 = vunpack.c.l.b16 %v146
  %v347 = vunpack.c.l.b16 %v147
  %v348 = vunpack.c.l.b16 %v148
  %v349 = vunpack.c.l.b16 %v149
  %v350 = vunpack.c.l.b16 %v150
  %v351 = vunpack.c.l.b16 %v151
  %v352 = vunpack.c.l.b16 %v152
  %v353 = vunpack.c.l.b16 %v153
  %v354 = vunpack.c.l.b16 %v154
  %v355 = vpack.c.b16 %v258, %v257
  %v356 = vpack.c.b16 %v260, %v259
  %v357 = vpack.c.b16 %v262, %v261
  %v358 = vpack.c.b16 %v264, %v263
  %v359 = vpack.c.b16 %v266, %v265
  %v360 = vpack.c.b16 %v268, %v267
  %v361 = vpack.c.b16 %v270, %v269
  %v362 = vpack.c.b16 %v272, %v271
  %v363 = vpack.c.b16 %v274, %v273
  %v364 = vpack.c.b16 %v276, %v275
  %v365 = vpack.c.b16 %v278, %v277
  %v366 = vpack.c.b16 %v280, %v279
  %v367 = vpack.c.b16 %v282, %v281
  %v368 = vpack.c.b16 %v284, %v283
  %v369 = vpack.c.b16 %v286, %v285
  %v370 = vpack.c.b16 %v288, %v287
  %v371 = vpack.c.b16 %v290, %v289
  %v372 = vpack.c.b16 %v292, %v291
  %v373 = vpack.c.b16 %v294, %v293
  %v374 = vpack.c.b16 %v296, %v295
  %v375 = vpack.c.b16 %v298, %v297
  %v376 = vpack.c.b16 %v300, %v299
  %v377 = vpack.c.b16 %v302, %v301
  %v378 = vpack.c.b16 %v304, %v303
  %v379 = vpack.c.b16 %v306, %v305
  %v380 = vpack.c.b16 %v308, %v307
  %v381 = vpack.c.b16 %v310, %v309
  %v382 = vpack.c.b16 %v312, %v311
  %v383 = vpack.c.b16 %v314, %v313
  %v384 = vpack.c.b16 %v316, %v315
  %v385 = vpack.c.b16 %v318, %v317
  %v386 = vpack.c.b16 %v320, %v319
  %v387 = vpack.c.b16 %v322, %v321
  %v388 = vpack.c.b16 %v324, %v323
  %v389 = vpack.c.b16 %v326, %v325
  %v390 = vpack.c.b16 %v328, %v327
  %v391 = vpack.c.b16 %v330, %v329
  %v392 = vpack.c.b16 %v332, %v331
  %v393 = vpack.c.b16 %v334, %v333
  %v394 = vpack.c.b16 %v336, %v335
  %v395 = vpack.c.b16 %v338, %v337
  %v396 = vpack.c.b16 %v340, %v339
  %v397 = vpack.c.b16 %v342, %v341
  %v398 = vpack.c.b16 %v344, %v343
  %v399 = vpack.c.b16 %v346, %v345
  %v400 = vpack.c.b16 %v348, %v347
  %v401 = vpack.c.b16 %v350, %v349
  %v402 = vpack.c.b16 %v352, %v351
  %v403 = vpack.c.b16 %v354, %v353
  %vm453 = vcmask 130048
  %v455 = vsel %vm453, %v49, 0
  %v458 = vsel %vm453, %v56, 0
  %460 = vmatpush.bf16.msra.mxu0 %v362
  %461 = vmatpush.bf16.msra.mxu0 %v361
  %462 = vmatpush.bf16.msra.mxu0 %v360
  %463 = vmatpush.bf16.msra.mxu0 %v359
  %464 = vmatpush.bf16.msra.mxu0 %v358
  %465 = vmatpush.bf16.msra.mxu0 %v357
  %466 = vmatpush.bf16.msra.mxu0 %v356
  %467 = vmatpush.bf16.msra.mxu0 %v355
  %468 = vmatmul.bf16.gmra.mxu0 %v43
  %v469 = vpop.f32.mrf.mxu0
  %v470 = vadd.f32 %v157, %v469
  %v471 = vpop.f32.mrf.mxu0
  %v472 = vadd.f32 %v157, %v471
  %473 = vmatmul.bf16.gmra.mxu0 %v50
  %v474 = vpop.f32.mrf.mxu0
  %v475 = vadd.f32 %v157, %v474
  %v476 = vpop.f32.mrf.mxu0
  %v477 = vadd.f32 %v157, %v476
  %478 = vdwg.mxu0
  %479 = vmatpush.bf16.msra.mxu0 %v370
  %480 = vmatpush.bf16.msra.mxu0 %v369
  %481 = vmatpush.bf16.msra.mxu0 %v368
  %482 = vmatpush.bf16.msra.mxu0 %v367
  %483 = vmatpush.bf16.msra.mxu0 %v366
  %484 = vmatpush.bf16.msra.mxu0 %v365
  %485 = vmatpush.bf16.msra.mxu0 %v364
  %486 = vmatpush.bf16.msra.mxu0 %v363
  %487 = vmatmul.bf16.gmra.mxu0 %v44
  %v488 = vpop.f32.mrf.mxu0
  %v489 = vadd.f32 %v470, %v488
  %v490 = vpop.f32.mrf.mxu0
  %v491 = vadd.f32 %v472, %v490
  %492 = vmatmul.bf16.gmra.mxu0 %v51
  %v493 = vpop.f32.mrf.mxu0
  %v494 = vadd.f32 %v475, %v493
  %v495 = vpop.f32.mrf.mxu0
  %v496 = vadd.f32 %v477, %v495
  %497 = vdwg.mxu0
  %498 = vmatpush.bf16.msra.mxu0 %v378
  %499 = vmatpush.bf16.msra.mxu0 %v377
  %500 = vmatpush.bf16.msra.mxu0 %v376
  %501 = vmatpush.bf16.msra.mxu0 %v375
  %502 = vmatpush.bf16.msra.mxu0 %v374
  %503 = vmatpush.bf16.msra.mxu0 %v373
  %504 = vmatpush.bf16.msra.mxu0 %v372
  %505 = vmatpush.bf16.msra.mxu0 %v371
  %506 = vmatmul.bf16.gmra.mxu0 %v45
  %v507 = vpop.f32.mrf.mxu0
  %v508 = vadd.f32 %v489, %v507
  %v509 = vpop.f32.mrf.mxu0
  %v510 = vadd.f32 %v491, %v509
  %511 = vmatmul.bf16.gmra.mxu0 %v52
  %v512 = vpop.f32.mrf.mxu0
  %v513 = vadd.f32 %v494, %v512
  %v514 = vpop.f32.mrf.mxu0
  %v515 = vadd.f32 %v496, %v514
  %516 = vdwg.mxu0
  %517 = vmatpush.bf16.msra.mxu0 %v386
  %518 = vmatpush.bf16.msra.mxu0 %v385
  %519 = vmatpush.bf16.msra.mxu0 %v384
  %520 = vmatpush.bf16.msra.mxu0 %v383
  %521 = vmatpush.bf16.msra.mxu0 %v382
  %522 = vmatpush.bf16.msra.mxu0 %v381
  %523 = vmatpush.bf16.msra.mxu0 %v380
  %524 = vmatpush.bf16.msra.mxu0 %v379
  %525 = vmatmul.bf16.gmra.mxu0 %v46
  %v526 = vpop.f32.mrf.mxu0
  %v527 = vadd.f32 %v508, %v526
  %v528 = vpop.f32.mrf.mxu0
  %v529 = vadd.f32 %v510, %v528
  %530 = vmatmul.bf16.gmra.mxu0 %v53
  %v531 = vpop.f32.mrf.mxu0
  %v532 = vadd.f32 %v513, %v531
  %v533 = vpop.f32.mrf.mxu0
  %v534 = vadd.f32 %v515, %v533
  %535 = vdwg.mxu0
  %536 = vmatpush.bf16.msra.mxu0 %v394
  %537 = vmatpush.bf16.msra.mxu0 %v393
  %538 = vmatpush.bf16.msra.mxu0 %v392
  %539 = vmatpush.bf16.msra.mxu0 %v391
  %540 = vmatpush.bf16.msra.mxu0 %v390
  %541 = vmatpush.bf16.msra.mxu0 %v389
  %542 = vmatpush.bf16.msra.mxu0 %v388
  %543 = vmatpush.bf16.msra.mxu0 %v387
  %544 = vmatmul.bf16.gmra.mxu0 %v47
  %v545 = vpop.f32.mrf.mxu0
  %v546 = vadd.f32 %v527, %v545
  %v547 = vpop.f32.mrf.mxu0
  %v548 = vadd.f32 %v529, %v547
  %549 = vmatmul.bf16.gmra.mxu0 %v54
  %v550 = vpop.f32.mrf.mxu0
  %v551 = vadd.f32 %v532, %v550
  %v552 = vpop.f32.mrf.mxu0
  %v553 = vadd.f32 %v534, %v552
  %554 = vdwg.mxu0
  %555 = vmatpush.bf16.msra.mxu0 %v402
  %556 = vmatpush.bf16.msra.mxu0 %v401
  %557 = vmatpush.bf16.msra.mxu0 %v400
  %558 = vmatpush.bf16.msra.mxu0 %v399
  %559 = vmatpush.bf16.msra.mxu0 %v398
  %560 = vmatpush.bf16.msra.mxu0 %v397
  %561 = vmatpush.bf16.msra.mxu0 %v396
  %562 = vmatpush.bf16.msra.mxu0 %v395
  %563 = vmatmul.bf16.gmra.mxu0 %v48
  %v564 = vpop.f32.mrf.mxu0
  %v565 = vadd.f32 %v546, %v564
  %v566 = vpop.f32.mrf.mxu0
  %v567 = vadd.f32 %v548, %v566
  %568 = vmatmul.bf16.gmra.mxu0 %v55
  %v569 = vpop.f32.mrf.mxu0
  %v570 = vadd.f32 %v551, %v569
  %v571 = vpop.f32.mrf.mxu0
  %v572 = vadd.f32 %v553, %v571
  %573 = vdwg.mxu0
  %574 = vmatpush.bf16.msra.mxu0 0
  %575 = vmatpush.bf16.msra.mxu0 0
  %576 = vmatpush.bf16.msra.mxu0 0
  %577 = vmatpush.bf16.msra.mxu0 0
  %578 = vmatpush.bf16.msra.mxu0 0
  %579 = vmatpush.bf16.msra.mxu0 0
  %580 = vmatpush.bf16.msra.mxu0 0
  %581 = vmatpush.bf16.msra.mxu0 %v403
  %582 = vmatmul.bf16.gmra.mxu0 %v455
  %v583 = vpop.f32.mrf.mxu0
  %v584 = vadd.f32 %v565, %v583
  %v585 = vpop.f32.mrf.mxu0
  %v586 = vadd.f32 %v567, %v585
  %587 = vmatmul.bf16.gmra.mxu0 %v458
  %v588 = vpop.f32.mrf.mxu0
  %v589 = vadd.f32 %v570, %v588
  %v590 = vpop.f32.mrf.mxu0
  %v591 = vadd.f32 %v572, %v590
  %592 = vdwg.mxu0
  %593 = vst [vmem:[%s3] sm:$0xff] %v584
  %594 = vst [vmem:[%s3 + $0x8] sm:$0xff] %v586
  %595 = vst [vmem:[%s3 + $0x10] sm:$0xff] %v589
  %596 = vst [vmem:[%s3 + $0x18] sm:$0xff] %v591
  // Predicated region
  $region14: #{rnn_forward.2} parent=0 // pred_check
    _
  $region15: #{rnn_forward.2} parent=0 // pred_check_branch
    %598 = sbr.rel (0) target = $region17
  $region16: #{rnn_forward.2} parent=0 // pred_region
    _
  $region17: #{rnn_forward.2} parent=0 // pred_fallthru
    _
  // Predicated region
  $region18: #{rnn_forward.2} parent=0 // pred_check
    _
  $region19: #{rnn_forward.2} parent=0 // pred_check_branch
    %600 = sbr.rel (0) target = $region21
  $region20: #{rnn_forward.2} parent=0 // pred_region
    _
  $region21: #{rnn_forward.2} parent=0 // pred_fallthru
    _

// kernel: rnn_forward.3
$region0: #{rnn_forward.3}
  #allocation0 [shape = 'u32[]', space=smem, size = 0x4, offset = 0x4, fixed_abs, tag = 'smem constant byte address 0x4 - core index']
  #allocation1 [shape = 'u32[72,128]{1,0:T(1,128)}', space=vmem, size = 0x9000, scoped, tag = 'internal scratch']
  %s0 = inlined_call_operand.vmem [shape: f32[8,4,128], index: 0, kind: input, shape index: {}]
  %s1 = inlined_call_operand.vmem [shape: bf16[128,128], index: 1, kind: input, shape index: {}]
  %s2 = inlined_call_operand.vmem [shape: bf16[128,128], index: 2, kind: input, shape index: {}]
  %s3 = inlined_call_operand.vmem [shape: f32[1,128], index: 3, kind: input, shape index: {}]
  %s4 = inlined_call_operand.hbm [shape: f32[8,128], index: 4, kind: output, shape index: {}]
  %s5 = sld [smem:[#allocation0]]
  $region26: #{rnn_forward.3} parent=0
    _
  %s7 = ssub.s32 1, %s5
  %s8 = scalar_select 0, %s7, %s5
  $region1: #{rnn_forward.3} parent=0
    #allocation2 [shape = 'u8[4096]{0}', space=vmem, size = 0x1000, scoped, tag = 'output window, operand 0, single buffered']
    #allocation3 [shape = 's32[1]{0}', space=sflag, size = 0x4, scoped, tag = 'scoped memory for rnn_forward.3']
    %9 = vsyncpa [#allocation3], 0
    // Predicated region
    $region2: #{rnn_forward.3} parent=1 // pred_check
      _
    $region3: #{rnn_forward.3} parent=1 // pred_check_branch
      %11 = sbr.rel (0) target = $region5
    $region4: #{rnn_forward.3} parent=1 // pred_region
      _
    $region5: #{rnn_forward.3} parent=1 // pred_fallthru
      _
    // Predicated region
    $region6: #{rnn_forward.3} parent=1 // pred_check
      _
    $region7: #{rnn_forward.3} parent=1 // pred_check_branch
      %13 = sbr.rel (0) target = $region9
    $region8: #{rnn_forward.3} parent=1 // pred_region
      _
    $region9: #{rnn_forward.3} parent=1 // pred_fallthru
      _
    // Predicated region
    $region10: #{rnn_forward.3} parent=1 // pred_check
      _
    $region11: #{rnn_forward.3} parent=1 // pred_check_branch
      %15 = sbr.rel (0) target = $region13
    $region12: #{rnn_forward.3} parent=1 // pred_region
      _
    $region13: #{rnn_forward.3} parent=1 // pred_fallthru
      _
    // Predicated region
    $region14: #{rnn_forward.3} parent=1 // pred_check
      _
    $region15: #{rnn_forward.3} parent=1 // pred_check_branch
      %17 = sbr.rel (0) target = $region17
    $region16: #{rnn_forward.3} parent=1 // pred_region
      _
    $region17: #{rnn_forward.3} parent=1 // pred_fallthru
      _
    %v18 = vld [vmem:[%s1] sm:$0xf]
    %v19 = vld [vmem:[%s1 + $0x4] sm:$0xf]
    %v20 = vld [vmem:[%s1 + $0x8] sm:$0xf]
    %v21 = vld [vmem:[%s1 + $0xc] sm:$0xf]
    %v22 = vld [vmem:[%s1 + $0x10] sm:$0xf]
    %v23 = vld [vmem:[%s1 + $0x14] sm:$0xf]
    %v24 = vld [vmem:[%s1 + $0x18] sm:$0xf]
    %v25 = vld [vmem:[%s1 + $0x1c] sm:$0xf]
    %v26 = vld [vmem:[%s1 + $0x20] sm:$0xf]
    %v27 = vld [vmem:[%s1 + $0x24] sm:$0xf]
    %v28 = vld [vmem:[%s1 + $0x28] sm:$0xf]
    %v29 = vld [vmem:[%s1 + $0x2c] sm:$0xf]
    %v30 = vld [vmem:[%s1 + $0x30] sm:$0xf]
    %v31 = vld [vmem:[%s1 + $0x34] sm:$0xf]
    %v32 = vld [vmem:[%s1 + $0x38] sm:$0xf]
    %v33 = vld [vmem:[%s1 + $0x3c] sm:$0xf]
    %v34 = vld [vmem:[%s0] sm:$0x1]
    %v35 = vld [vmem:[%s0 + $0x4] sm:$0x1]
    %v36 = vld [vmem:[%s0 + $0x8] sm:$0x1]
    %v37 = vld [vmem:[%s0 + $0xc] sm:$0x1]
    %v38 = vld [vmem:[%s0 + $0x10] sm:$0x1]
    %v39 = vld [vmem:[%s0 + $0x14] sm:$0x1]
    %v40 = vld [vmem:[%s0 + $0x18] sm:$0x1]
    %v41 = vld [vmem:[%s0 + $0x1c] sm:$0x1]
    %v42 = vtanh.pop %v34
    %v43 = vtanh.pop %v35
    %v44 = vtanh.pop %v36
    %v45 = vtanh.pop %v37
    %v46 = vtanh.pop %v38
    %v47 = vtanh.pop %v39
    %v48 = vtanh.pop %v40
    %v49 = vtanh.pop %v41
    %v50 = vpack.c.bf16 %v42, %v42
    %v51 = vpack.c.bf16 %v43, %v43
    %v52 = vpack.c.bf16 %v44, %v44
    %v53 = vpack.c.bf16 %v45, %v45
    %v54 = vpack.c.bf16 %v46, %v46
    %v55 = vpack.c.bf16 %v47, %v47
    %v56 = vpack.c.bf16 %v48, %v48
    %v57 = vpack.c.bf16 %v49, %v49
    %v66 = vunpack.c.l.b16 %v50
    %v67 = vunpack.c.l.b16 %v51
    %v68 = vunpack.c.l.b16 %v52
    %v69 = vunpack.c.l.b16 %v53
    %v70 = vunpack.c.l.b16 %v54
    %v71 = vunpack.c.l.b16 %v55
    %v72 = vunpack.c.l.b16 %v56
    %v73 = vunpack.c.l.b16 %v57
    %v74 = vrot.slane %v67, 7
    %vm75 = vcmask 1041409
    %v76 = vsel %vm75, %v74, %v66
    %v77 = vrot.slane %v68, 6
    %vm78 = vcmask 1042434
    %v79 = vsel %vm78, %v77, %v76
    %v80 = vrot.slane %v69, 5
    %vm81 = vcmask 1043459
    %v82 = vsel %vm81, %v80, %v79
    %v83 = vrot.slane %v70, 4
    %vm84 = vcmask 1044484
    %v85 = vsel %vm84, %v83, %v82
    %v86 = vrot.slane %v71, 3
    %vm87 = vcmask 1045509
    %v88 = vsel %vm87, %v86, %v85
    %v89 = vrot.slane %v72, 2
    %vm90 = vcmask 1046534
    %v91 = vsel %vm90, %v89, %v88
    %v92 = vrot.slane %v73, 1
    %vm93 = vcmask 1047559
    %v94 = vsel %vm93, %v92, %v91
    %v95 = vpack.c.b16 %v94, %v94
    %v113 = vunpack.c.l.b16 %v18
    %v114 = vunpack.c.l.b16 %v19
    %v115 = vunpack.c.l.b16 %v20
    %v116 = vunpack.c.l.b16 %v21
    %v117 = vunpack.c.l.b16 %v22
    %v118 = vunpack.c.l.b16 %v23
    %v119 = vunpack.c.l.b16 %v24
    %v120 = vunpack.c.l.b16 %v25
    %v121 = vunpack.c.l.b16 %v26
    %v122 = vunpack.c.l.b16 %v27
    %v123 = vunpack.c.l.b16 %v28
    %v124 = vunpack.c.l.b16 %v29
    %v125 = vunpack.c.l.b16 %v30
    %v126 = vunpack.c.l.b16 %v31
    %v127 = vunpack.c.l.b16 %v32
    %v128 = vunpack.c.l.b16 %v33
    %v129 = vpack.c.b16 %v114, %v113
    %v130 = vpack.c.b16 %v116, %v115
    %v131 = vpack.c.b16 %v118, %v117
    %v132 = vpack.c.b16 %v120, %v119
    %v133 = vpack.c.b16 %v122, %v121
    %v134 = vpack.c.b16 %v124, %v123
    %v135 = vpack.c.b16 %v126, %v125
    %v136 = vpack.c.b16 %v128, %v127
    %145 = vmatpush.bf16.msra.mxu0 %v136
    %146 = vmatpush.bf16.msra.mxu0 %v135
    %147 = vmatpush.bf16.msra.mxu0 %v134
    %148 = vmatpush.bf16.msra.mxu0 %v133
    %149 = vmatpush.bf16.msra.mxu0 %v132
    %150 = vmatpush.bf16.msra.mxu0 %v131
    %151 = vmatpush.bf16.msra.mxu0 %v130
    %152 = vmatpush.bf16.msra.mxu0 %v129
    %153 = vmatmul.bf16.gmra.mxu0 %v95
    %v154 = vpop.f32.mrf.mxu0
    %v155 = vadd.f32 0.0, %v154
    %v156 = vpop.f32.mrf.mxu0
    %157 = vdwg.mxu0
    %v158 = vld [vmem:[%s0 + $0x1] sm:$0x1]
    %v159 = vld [vmem:[%s0 + $0x5] sm:$0x1]
    %v160 = vld [vmem:[%s0 + $0x9] sm:$0x1]
    %v161 = vld [vmem:[%s0 + $0xd] sm:$0x1]
    %v162 = vld [vmem:[%s0 + $0x11] sm:$0x1]
    %v163 = vld [vmem:[%s0 + $0x15] sm:$0x1]
    %v164 = vld [vmem:[%s0 + $0x19] sm:$0x1]
    %v165 = vld [vmem:[%s0 + $0x1d] sm:$0x1]
    %v167 = vrot.slane %v155, 1
    %v168 = vrot.slane %v155, 2
    %v169 = vrot.slane %v155, 3
    %v170 = vrot.slane %v155, 4
    %v171 = vrot.slane %v155, 5
    %v172 = vrot.slane %v155, 6
    %v173 = vrot.slane %v155, 7
    %v182 = vadd.f32 %v158, %v155
    %v183 = vadd.f32 %v159, %v167
    %v184 = vadd.f32 %v160, %v168
    %v185 = vadd.f32 %v161, %v169
    %v186 = vadd.f32 %v162, %v170
    %v187 = vadd.f32 %v163, %v171
    %v188 = vadd.f32 %v164, %v172
    %v189 = vadd.f32 %v165, %v173
    %v190 = vtanh.pop %v182
    %v191 = vtanh.pop %v183
    %v192 = vtanh.pop %v184
    %v193 = vtanh.pop %v185
    %v194 = vtanh.pop %v186
    %v195 = vtanh.pop %v187
    %v196 = vtanh.pop %v188
    %v197 = vtanh.pop %v189
    %v198 = vpack.c.bf16 %v190, %v190
    %v199 = vpack.c.bf16 %v191, %v191
    %v200 = vpack.c.bf16 %v192, %v192
    %v201 = vpack.c.bf16 %v193, %v193
    %v202 = vpack.c.bf16 %v194, %v194
    %v203 = vpack.c.bf16 %v195, %v195
    %v204 = vpack.c.bf16 %v196, %v196
    %v205 = vpack.c.bf16 %v197, %v197
    %v214 = vunpack.c.l.b16 %v198
    %v215 = vunpack.c.l.b16 %v199
    %v216 = vunpack.c.l.b16 %v200
    %v217 = vunpack.c.l.b16 %v201
    %v218 = vunpack.c.l.b16 %v202
    %v219 = vunpack.c.l.b16 %v203
    %v220 = vunpack.c.l.b16 %v204
    %v221 = vunpack.c.l.b16 %v205
    %v222 = vrot.slane %v215, 7
    %v223 = vsel %vm75, %v222, %v214
    %v224 = vrot.slane %v216, 6
    %v225 = vsel %vm78, %v224, %v223
    %v226 = vrot.slane %v217, 5
    %v227 = vsel %vm81, %v226, %v225
    %v228 = vrot.slane %v218, 4
    %v229 = vsel %vm84, %v228, %v227
    %v230 = vrot.slane %v219, 3
    %v231 = vsel %vm87, %v230, %v229
    %v232 = vrot.slane %v220, 2
    %v233 = vsel %vm90, %v232, %v231
    %v234 = vrot.slane %v221, 1
    %v235 = vsel %vm93, %v234, %v233
    %v236 = vpack.c.b16 %v235, %v235
    %238 = vmatpush.bf16.msra.mxu0 %v136
    %239 = vmatpush.bf16.msra.mxu0 %v135
    %240 = vmatpush.bf16.msra.mxu0 %v134
    %241 = vmatpush.bf16.msra.mxu0 %v133
    %242 = vmatpush.bf16.msra.mxu0 %v132
    %243 = vmatpush.bf16.msra.mxu0 %v131
    %244 = vmatpush.bf16.msra.mxu0 %v130
    %245 = vmatpush.bf16.msra.mxu0 %v129
    %246 = vmatmul.bf16.gmra.mxu0 %v236
    %v247 = vpop.f32.mrf.mxu0
    %v248 = vadd.f32 0.0, %v247
    %v249 = vpop.f32.mrf.mxu0
    %250 = vdwg.mxu0
    %v251 = vld [vmem:[%s0 + $0x2] sm:$0x1]
    %v252 = vld [vmem:[%s0 + $0x6] sm:$0x1]
    %v253 = vld [vmem:[%s0 + $0xa] sm:$0x1]
    %v254 = vld [vmem:[%s0 + $0xe] sm:$0x1]
    %v255 = vld [vmem:[%s0 + $0x12] sm:$0x1]
    %v256 = vld [vmem:[%s0 + $0x16] sm:$0x1]
    %v257 = vld [vmem:[%s0 + $0x1a] sm:$0x1]
    %v258 = vld [vmem:[%s0 + $0x1e] sm:$0x1]
    %v260 = vrot.slane %v248, 1
    %v261 = vrot.slane %v248, 2
    %v262 = vrot.slane %v248, 3
    %v263 = vrot.slane %v248, 4
    %v264 = vrot.slane %v248, 5
    %v265 = vrot.slane %v248, 6
    %v266 = vrot.slane %v248, 7
    %v275 = vadd.f32 %v251, %v248
    %v276 = vadd.f32 %v252, %v260
    %v277 = vadd.f32 %v253, %v261
    %v278 = vadd.f32 %v254, %v262
    %v279 = vadd.f32 %v255, %v263
    %v280 = vadd.f32 %v256, %v264
    %v281 = vadd.f32 %v257, %v265
    %v282 = vadd.f32 %v258, %v266
    %v283 = vtanh.pop %v275
    %v284 = vtanh.pop %v276
    %v285 = vtanh.pop %v277
    %v286 = vtanh.pop %v278
    %v287 = vtanh.pop %v279
    %v288 = vtanh.pop %v280
    %v289 = vtanh.pop %v281
    %v290 = vtanh.pop %v282
    %v291 = vpack.c.bf16 %v283, %v283
    %v292 = vpack.c.bf16 %v284, %v284
    %v293 = vpack.c.bf16 %v285, %v285
    %v294 = vpack.c.bf16 %v286, %v286
    %v295 = vpack.c.bf16 %v287, %v287
    %v296 = vpack.c.bf16 %v288, %v288
    %v297 = vpack.c.bf16 %v289, %v289
    %v298 = vpack.c.bf16 %v290, %v290
    %v307 = vunpack.c.l.b16 %v291
    %v308 = vunpack.c.l.b16 %v292
    %v309 = vunpack.c.l.b16 %v293
    %v310 = vunpack.c.l.b16 %v294
    %v311 = vunpack.c.l.b16 %v295
    %v312 = vunpack.c.l.b16 %v296
    %v313 = vunpack.c.l.b16 %v297
    %v314 = vunpack.c.l.b16 %v298
    %v315 = vrot.slane %v308, 7
    %v316 = vsel %vm75, %v315, %v307
    %v317 = vrot.slane %v309, 6
    %v318 = vsel %vm78, %v317, %v316
    %v319 = vrot.slane %v310, 5
    %v320 = vsel %vm81, %v319, %v318
    %v321 = vrot.slane %v311, 4
    %v322 = vsel %vm84, %v321, %v320
    %v323 = vrot.slane %v312, 3
    %v324 = vsel %vm87, %v323, %v322
    %v325 = vrot.slane %v313, 2
    %v326 = vsel %vm90, %v325, %v324
    %v327 = vrot.slane %v314, 1
    %v328 = vsel %vm93, %v327, %v326
    %v329 = vpack.c.b16 %v328, %v328
    %331 = vmatpush.bf16.msra.mxu0 %v136
    %332 = vmatpush.bf16.msra.mxu0 %v135
    %333 = vmatpush.bf16.msra.mxu0 %v134
    %334 = vmatpush.bf16.msra.mxu0 %v133
    %335 = vmatpush.bf16.msra.mxu0 %v132
    %336 = vmatpush.bf16.msra.mxu0 %v131
    %337 = vmatpush.bf16.msra.mxu0 %v130
    %338 = vmatpush.bf16.msra.mxu0 %v129
    %339 = vmatmul.bf16.gmra.mxu0 %v329
    %v340 = vpop.f32.mrf.mxu0
    %v341 = vadd.f32 0.0, %v340
    %v342 = vpop.f32.mrf.mxu0
    %343 = vdwg.mxu0
    %v344 = vld [vmem:[%s0 + $0x3] sm:$0x1]
    %v345 = vld [vmem:[%s0 + $0x7] sm:$0x1]
    %v346 = vld [vmem:[%s0 + $0xb] sm:$0x1]
    %v347 = vld [vmem:[%s0 + $0xf] sm:$0x1]
    %v348 = vld [vmem:[%s0 + $0x13] sm:$0x1]
    %v349 = vld [vmem:[%s0 + $0x17] sm:$0x1]
    %v350 = vld [vmem:[%s0 + $0x1b] sm:$0x1]
    %v351 = vld [vmem:[%s0 + $0x1f] sm:$0x1]
    %v353 = vrot.slane %v341, 1
    %v354 = vrot.slane %v341, 2
    %v355 = vrot.slane %v341, 3
    %v356 = vrot.slane %v341, 4
    %v357 = vrot.slane %v341, 5
    %v358 = vrot.slane %v341, 6
    %v359 = vrot.slane %v341, 7
    %v368 = vadd.f32 %v344, %v341
    %v369 = vadd.f32 %v345, %v353
    %v370 = vadd.f32 %v346, %v354
    %v371 = vadd.f32 %v347, %v355
    %v372 = vadd.f32 %v348, %v356
    %v373 = vadd.f32 %v349, %v357
    %v374 = vadd.f32 %v350, %v358
    %v375 = vadd.f32 %v351, %v359
    %v376 = vtanh.pop %v368
    %v377 = vtanh.pop %v369
    %v378 = vtanh.pop %v370
    %v379 = vtanh.pop %v371
    %v380 = vtanh.pop %v372
    %v381 = vtanh.pop %v373
    %v382 = vtanh.pop %v374
    %v383 = vtanh.pop %v375
    %v384 = vpack.c.bf16 %v376, %v376
    %v385 = vpack.c.bf16 %v377, %v377
    %v386 = vpack.c.bf16 %v378, %v378
    %v387 = vpack.c.bf16 %v379, %v379
    %v388 = vpack.c.bf16 %v380, %v380
    %v389 = vpack.c.bf16 %v381, %v381
    %v390 = vpack.c.bf16 %v382, %v382
    %v391 = vpack.c.bf16 %v383, %v383
    %v392 = vld [vmem:[%s2] sm:$0xf]
    %v393 = vld [vmem:[%s2 + $0x4] sm:$0xf]
    %v394 = vld [vmem:[%s2 + $0x8] sm:$0xf]
    %v395 = vld [vmem:[%s2 + $0xc] sm:$0xf]
    %v396 = vld [vmem:[%s2 + $0x10] sm:$0xf]
    %v397 = vld [vmem:[%s2 + $0x14] sm:$0xf]
    %v398 = vld [vmem:[%s2 + $0x18] sm:$0xf]
    %v399 = vld [vmem:[%s2 + $0x1c] sm:$0xf]
    %v400 = vld [vmem:[%s2 + $0x20] sm:$0xf]
    %v401 = vld [vmem:[%s2 + $0x24] sm:$0xf]
    %v402 = vld [vmem:[%s2 + $0x28] sm:$0xf]
    %v403 = vld [vmem:[%s2 + $0x2c] sm:$0xf]
    %v404 = vld [vmem:[%s2 + $0x30] sm:$0xf]
    %v405 = vld [vmem:[%s2 + $0x34] sm:$0xf]
    %v406 = vld [vmem:[%s2 + $0x38] sm:$0xf]
    %v407 = vld [vmem:[%s2 + $0x3c] sm:$0xf]
    %v408 = vld [vmem:[%s3] sm:$0x1]
    %v410 = vperm.slane %v408, 0
    %v420 = vunpack.c.l.b16 %v384
    %v421 = vunpack.c.l.b16 %v385
    %v422 = vunpack.c.l.b16 %v386
    %v423 = vunpack.c.l.b16 %v387
    %v424 = vunpack.c.l.b16 %v388
    %v425 = vunpack.c.l.b16 %v389
    %v426 = vunpack.c.l.b16 %v390
    %v427 = vunpack.c.l.b16 %v391
    %v428 = vrot.slane %v421, 7
    %v429 = vsel %vm75, %v428, %v420
    %v430 = vrot.slane %v422, 6
    %v431 = vsel %vm78, %v430, %v429
    %v432 = vrot.slane %v423, 5
    %v433 = vsel %vm81, %v432, %v431
    %v434 = vrot.slane %v424, 4
    %v435 = vsel %vm84, %v434, %v433
    %v436 = vrot.slane %v425, 3
    %v437 = vsel %vm87, %v436, %v435
    %v438 = vrot.slane %v426, 2
    %v439 = vsel %vm90, %v438, %v437
    %v440 = vrot.slane %v427, 1
    %v441 = vsel %vm93, %v440, %v439
    %v442 = vpack.c.b16 %v441, %v441
    %v460 = vunpack.c.l.b16 %v392
    %v461 = vunpack.c.l.b16 %v393
    %v462 = vunpack.c.l.b16 %v394
    %v463 = vunpack.c.l.b16 %v395
    %v464 = vunpack.c.l.b16 %v396
    %v465 = vunpack.c.l.b16 %v397
    %v466 = vunpack.c.l.b16 %v398
    %v467 = vunpack.c.l.b16 %v399
    %v468 = vunpack.c.l.b16 %v400
    %v469 = vunpack.c.l.b16 %v401
    %v470 = vunpack.c.l.b16 %v402
    %v471 = vunpack.c.l.b16 %v403
    %v472 = vunpack.c.l.b16 %v404
    %v473 = vunpack.c.l.b16 %v405
    %v474 = vunpack.c.l.b16 %v406
    %v475 = vunpack.c.l.b16 %v407
    %v476 = vpack.c.b16 %v461, %v460
    %v477 = vpack.c.b16 %v463, %v462
    %v478 = vpack.c.b16 %v465, %v464
    %v479 = vpack.c.b16 %v467, %v466
    %v480 = vpack.c.b16 %v469, %v468
    %v481 = vpack.c.b16 %v471, %v470
    %v482 = vpack.c.b16 %v473, %v472
    %v483 = vpack.c.b16 %v475, %v474
    %492 = vmatpush.bf16.msra.mxu0 %v483
    %493 = vmatpush.bf16.msra.mxu0 %v482
    %494 = vmatpush.bf16.msra.mxu0 %v481
    %495 = vmatpush.bf16.msra.mxu0 %v480
    %496 = vmatpush.bf16.msra.mxu0 %v479
    %497 = vmatpush.bf16.msra.mxu0 %v478
    %498 = vmatpush.bf16.msra.mxu0 %v477
    %499 = vmatpush.bf16.msra.mxu0 %v476
    %500 = vmatmul.bf16.gmra.mxu0 %v442
    %v501 = vpop.f32.mrf.mxu0
    %v502 = vadd.f32 %v410, %v501
    %v503 = vpop.f32.mrf.mxu0
    %504 = vdwg.mxu0
    %505 = vst [vmem:[#allocation2] sm:$0xff] %v502
    // Predicated region
    $region18: #{rnn_forward.3} parent=1 // pred_check
      _
    $region19: #{rnn_forward.3} parent=1 // pred_check_branch
      %507 = sbr.rel (0) target = $region21
    $region20: #{rnn_forward.3} parent=1 // pred_region
      %509 = vsyncadd [#allocation3], 0
      %s511 = sshll.u32 [#allocation2], 4
      %s512 = int_to_ptr.vmem [resolvable:$true] %s511
      %s513 = sshll.u32 %s4, 4
      %s514 = int_to_ptr.hbm [resolvable:$true] %s513
      %516 = dma.vmem_to_hbm [thread:$0]  %s512, 128, %s514, [#allocation3]
    $region21: #{rnn_forward.3} parent=1 // pred_fallthru
      _
    // Predicated region
    $region22: #{rnn_forward.3} parent=1 // pred_check
      _
    $region23: #{rnn_forward.3} parent=1 // pred_check_branch
      %518 = sbr.rel (0) target = $region25
    $region24: #{rnn_forward.3} parent=1 // pred_region
      %520 = dma.done [#allocation3], 128
    $region25: #{rnn_forward.3} parent=1 // pred_fallthru
      _
    %521 = vsyncpa [#allocation3], 1

</llo_original>
